<compile_context>
chip_gen: v6e
topology: v6e:2x2x1
jax: 0.10.0
libtpu: 0.0.40
codegen_flags: <defaults>
</compile_context>

<pallas_src>
import jax
import jax.numpy as jnp
from jax.experimental import pallas as pl
from jax.experimental.pallas import tpu as pltpu


def _round_up(x, m):
    return (x + m - 1) // m * m


def cdm_packed_kernel(xp_ref, wblk_ref, ones_ref, out_ref):
    """One tile of packed rows.

    xp_ref  : (TR, 128)  `per` samples per row, each occupying n consecutive lanes
    wblk_ref: (128, 128) block-diagonal with `per` copies of W^T (W = fs @ cs)
    ones_ref: (128, 128) block-diagonal with `per` copies of ones((n, n))
    out_ref : (TR, 128)  per-sample log-probabilities in the same packed layout
    """
    xp = xp_ref[...].astype(jnp.float32)                               # (TR, 128)

    # scores[r, n*s + i] = (W @ x_sample)[i]  -- one lane-dense MXU pass.
    scores = jnp.dot(xp, wblk_ref[...], preferred_element_type=jnp.float32)

    # Exact PyTorch blend (also correct for non-binary indicators).
    u = xp * scores + (1.0 - xp) * (-16.0)

    # Shift by the packed-row max (>= every segment max) -> exp never overflows;
    # log_softmax is shift-invariant so the math stays exact.
    u = u - jnp.max(u, axis=-1, keepdims=True)
    e = jnp.exp(u)

    # Per-16-lane-segment sums, broadcast back within each segment, via the MXU.
    seg = jnp.dot(e, ones_ref[...], preferred_element_type=jnp.float32)

    out_ref[...] = (u - jnp.log(seg)).astype(out_ref.dtype)


def cdm_reference(x, fs, cs):
    """Pure-JAX reference matching the PyTorch forward."""
    x = jnp.asarray(x, jnp.float32)
    if x.ndim == 1:
        x = x[None, :]
    scores = jnp.einsum("bj,ik,kj->bi", x, fs.astype(jnp.float32),
                        cs.astype(jnp.float32))
    u = x * scores + (1.0 - x) * (-16.0)
    return jax.nn.log_softmax(u, axis=-1)


def cdm_forward(x, fs, cs, *, block_rows=512, min_pallas_batch=512):
    """CDM forward.

    x : (n,) or (B, n) indicator rows (any float dtype; bf16 {0,1} is exact)
    fs: (n, d) item feature embeddings
    cs: (d, n) context embeddings
    Returns row-wise log-probabilities (float32) with the same leading shape as x.

    block_rows is the tile-size sweep knob (packed rows per grid step;
    512 rows = 512 * (128/n) samples, ~384 KiB DMA/step at n=16).
    """
    x = jnp.asarray(x)
    if not jnp.issubdtype(x.dtype, jnp.floating):
        x = x.astype(jnp.float32)
    squeeze = x.ndim == 1
    if squeeze:
        x = x[None, :]
    B, n = x.shape

    # Small-batch / awkward-n dispatch: pallas_call launch + pipeline setup would
    # dominate the entire op for tiny B, and the packed layout needs n | 128.
    if B < min_pallas_batch or n > 128 or 128 % n != 0:
        # TODO(synk): dedicated Pallas path for n not dividing 128 (lane-transposed (n, B) layout).
        out = cdm_reference(x, fs, cs)
        return out[0] if squeeze else out

    per = 128 // n  # samples packed per 128-lane row

    # Parameter fusion, done once outside the kernel: W = fs @ cs  (f32 for accuracy).
    w = jnp.dot(fs.astype(jnp.float32), cs.astype(jnp.float32))          # (n, n)
    eye = jnp.eye(per, dtype=jnp.float32)
    w_blk = jnp.kron(eye, w.T)                                           # (128, 128)
    ones_blk = jnp.kron(eye, jnp.ones((n, n), jnp.float32))              # (128, 128)

    # Tile selection: as large as block_rows allows, but keep >=4 grid steps so the
    # "parallel" batch axis can feed both v7x TensorCores and the pipeline.
    B1 = _round_up(B, per)
    R = B1 // per                                  # packed rows
    tr = max(16, min(block_rows, _round_up(pl.cdiv(R, 4), 16)))
    Rp = _round_up(R, tr)
    Bp = Rp * per

    xp = x if Bp == B else jnp.pad(x, ((0, Bp - B), (0, 0)))
    xp = xp.reshape(Rp, per * n)                   # free row-major view -> (Rp, 128)

    out_packed = pl.pallas_call(
        cdm_packed_kernel,
        out_shape=jax.ShapeDtypeStruct((Rp, 128), jnp.float32),
        grid=(Rp // tr,),
        in_specs=[
            pl.BlockSpec((tr, 128), lambda i: (i, 0)),     # packed x tile
            pl.BlockSpec((128, 128), lambda i: (0, 0)),    # block-diag W^T (resident)
            pl.BlockSpec((128, 128), lambda i: (0, 0)),    # block-diag ones (resident)
        ],
        out_specs=pl.BlockSpec((tr, 128), lambda i: (i, 0)),
        compiler_params=pltpu.CompilerParams(
            dimension_semantics=("parallel",)),            # batch axis -> megacore on v7x
    )(xp, w_blk, ones_blk)

    out = out_packed.reshape(Bp, n)[:B]            # free view; slice only if padded
    return out[0] if squeeze else out


if __name__ == "__main__":
    # Deterministic synthetic parameters (nn.init.normal -> std normal).
    n, d, B = 16, 8, 4096
    key = jax.random.PRNGKey(0)
    k_fs, k_cs, k_x = jax.random.split(key, 3)
    fs = jax.random.normal(k_fs, (n, d), dtype=jnp.float32)   # item features
    cs = jax.random.normal(k_cs, (d, n), dtype=jnp.float32)   # context embeddings

    # Batch of indicator ("size(S)-hot") vectors, stored in bf16 ({0,1} is exact,
    # halves the kernel's input DMA).  Ensure each choice set is nonempty.
    x = jax.random.bernoulli(k_x, 0.5, (B, n)).astype(jnp.bfloat16)
    x = x.at[:, 0].set(1.0)

    out = jax.block_until_ready(cdm_forward(x, fs, cs))
    ref = cdm_reference(x, fs, cs)
    assert out.shape == (B, n)
    assert bool(jnp.all(jnp.isfinite(out)))
    assert jnp.allclose(out, ref, atol=2e-4, rtol=2e-4), "batched mismatch vs reference"

    # Single-vector path (the exact PyTorch call signature) -> small-batch dispatch.
    out1 = jax.block_until_ready(cdm_forward(x[0], fs, cs))
    assert out1.shape == (n,)
    assert jnp.allclose(out1, ref[0], atol=2e-4, rtol=2e-4), "single-row mismatch"

    print("KERNEL_OK")
</pallas_src>

<mosaic_0001>
module attributes {stable_mosaic.version = 11 : i64} {
  func.func @cdm_packed_kernel(%arg0: i32, %arg1: memref<128x128xbf16, #tpu.memory_space<vmem>>, %arg2: memref<128x128xf32, #tpu.memory_space<vmem>>, %arg3: memref<128x128xf32, #tpu.memory_space<vmem>>, %arg4: memref<128x128xf32, #tpu.memory_space<vmem>>) attributes {dimension_semantics = [#tpu.dimension_semantics<parallel>], iteration_bounds = array<i64: 4>, scalar_prefetch = 0 : i64, scratch_operands = 0 : i64, tpu.core_type = #tpu.core_type<tc>, window_params = [{transform_indices = @transform_0, window_bounds = array<i64: 128, 128>}, {pipeline_mode = #tpu.pipeline_mode<synchronous>, transform_indices = @transform_1, window_bounds = array<i64: 128, 128>}, {pipeline_mode = #tpu.pipeline_mode<synchronous>, transform_indices = @transform_2, window_bounds = array<i64: 128, 128>}, {transform_indices = @transform_3, window_bounds = array<i64: 128, 128>}]} {
    %c0 = arith.constant 0 : index
    %c0_0 = arith.constant 0 : index
    %0 = vector.load %arg1[%c0, %c0_0] : memref<128x128xbf16, #tpu.memory_space<vmem>>, vector<128x128xbf16>
    %1 = arith.extf %0 : vector<128x128xbf16> to vector<128x128xf32>
    %c0_1 = arith.constant 0 : index
    %c0_2 = arith.constant 0 : index
    %2 = vector.load %arg2[%c0_1, %c0_2] : memref<128x128xf32, #tpu.memory_space<vmem>>, vector<128x128xf32>
    %cst = arith.constant dense<0.000000e+00> : vector<128x128xf32>
    %3 = tpu.matmul %1, %2, %cst {dimension_numbers = #tpu.dot_dimension_numbers<[1], [0], [0], [1], [0, 0, 1, 1], [], []>} : vector<128x128xf32>, vector<128x128xf32>, vector<128x128xf32> -> vector<128x128xf32>
    %4 = arith.mulf %1, %3 : vector<128x128xf32>
    %cst_3 = arith.constant 1.000000e+00 : f32
    %5 = vector.broadcast %cst_3 : f32 to vector<128x128xf32>
    %6 = arith.subf %5, %1 : vector<128x128xf32>
    %cst_4 = arith.constant -1.600000e+01 : f32
    %7 = vector.broadcast %cst_4 : f32 to vector<128x128xf32>
    %8 = arith.mulf %6, %7 : vector<128x128xf32>
    %9 = arith.addf %4, %8 : vector<128x128xf32>
    %cst_5 = arith.constant dense<0xFF800000> : vector<128xf32>
    %10 = vector.multi_reduction <maximumf>, %9, %cst_5 [1] : vector<128x128xf32> to vector<128xf32>
    %11 = vector.shape_cast %10 : vector<128xf32> to vector<128x1xf32>
    %12 = vector.broadcast %11 : vector<128x1xf32> to vector<128x128xf32>
    %13 = arith.subf %9, %12 : vector<128x128xf32>
    %14 = math.exp %13 : vector<128x128xf32>
    %c0_6 = arith.constant 0 : index
    %c0_7 = arith.constant 0 : index
    %15 = vector.load %arg3[%c0_6, %c0_7] : memref<128x128xf32, #tpu.memory_space<vmem>>, vector<128x128xf32>
    %cst_8 = arith.constant dense<0.000000e+00> : vector<128x128xf32>
    %16 = tpu.matmul %14, %15, %cst_8 {dimension_numbers = #tpu.dot_dimension_numbers<[1], [0], [0], [1], [0, 0, 1, 1], [], []>} : vector<128x128xf32>, vector<128x128xf32>, vector<128x128xf32> -> vector<128x128xf32>
    %17 = math.log %16 : vector<128x128xf32>
    %18 = arith.subf %13, %17 : vector<128x128xf32>
    %c0_9 = arith.constant 0 : index
    %c0_10 = arith.constant 0 : index
    %19 = vector.load %arg4[%c0_9, %c0_10] : memref<128x128xf32, #tpu.memory_space<vmem>>, vector<128x128xf32>
    tpu.vector_store %arg4[%c0_9, %c0_10], %18 {strides = array<i32>} : memref<128x128xf32, #tpu.memory_space<vmem>>, vector<128x128xf32>,
    return
  }
  func.func @transform_0(%arg0: i32) -> (i32, i32) {
    %c0_i32 = arith.constant 0 : i32
    %c0_i32_0 = arith.constant 0 : i32
    return %arg0, %c0_i32 : i32, i32
  }
  func.func @transform_1(%arg0: i32) -> (i32, i32) {
    %c0_i32 = arith.constant 0 : i32
    %c0_i32_0 = arith.constant 0 : i32
    %c0_i32_1 = arith.constant 0 : i32
    return %c0_i32, %c0_i32_0 : i32, i32
  }
  func.func @transform_2(%arg0: i32) -> (i32, i32) {
    %c0_i32 = arith.constant 0 : i32
    %c0_i32_0 = arith.constant 0 : i32
    %c0_i32_1 = arith.constant 0 : i32
    return %c0_i32, %c0_i32_0 : i32, i32
  }
  func.func @transform_3(%arg0: i32) -> (i32, i32) {
    %c0_i32 = arith.constant 0 : i32
    %c0_i32_0 = arith.constant 0 : i32
    return %arg0, %c0_i32 : i32, i32
  }
}

</mosaic_0001>

<llo_original>
// kernel: tpu_custom_call.1
$region0: #{tpu_custom_call.1}
  #allocation0 [shape = 'u32[]', space=smem, size = 0x4, offset = 0x4, fixed_abs, tag = 'smem constant byte address 0x4 - core index']
  #allocation1 [shape = 'u32[144,128]{1,0:T(1,128)}', space=vmem, size = 0x12000, scoped, tag = 'internal scratch']
  %s0 = inlined_call_operand.hbm [shape: bf16[512,128], index: 0, kind: input, shape index: {}]
  %s1 = inlined_call_operand.hbm [shape: f32[128,128], index: 1, kind: input, shape index: {}]
  %s2 = inlined_call_operand.hbm [shape: f32[128,128], index: 2, kind: input, shape index: {}]
  %s3 = inlined_call_operand.hbm [shape: f32[512,128], index: 3, kind: output, shape index: {}]
  %s4 = sld [smem:[#allocation0]]
  $region57: #{tpu_custom_call.1} parent=0
    _
  %s6 = ssub.s32 1, %s4
  %s7 = scalar_select 0, %s6, %s4
  $region1: #{tpu_custom_call.1} parent=0
    #allocation2 [shape = 'u8[65536]{0}', space=vmem, size = 0x10000, scoped, tag = 'input window, operand 0']
    #allocation3 [shape = 's32[2]{0}', space=sflag, size = 0x8, scoped, tag = 'scoped memory for tpu_custom_call.1']
    #allocation4 [shape = 's32[2]{0}', space=sflag, size = 0x8, scoped, tag = 'scoped memory for tpu_custom_call.1']
    #allocation5 [shape = 'u8[65536]{0}', space=vmem, size = 0x10000, scoped, tag = 'input window, operand 1, single buffered']
    #allocation6 [shape = 's32[1]{0}', space=sflag, size = 0x4, scoped, tag = 'scoped memory for tpu_custom_call.1']
    #allocation7 [shape = 'u8[65536]{0}', space=vmem, size = 0x10000, scoped, tag = 'input window, operand 2, single buffered']
    #allocation8 [shape = 'u8[131072]{0}', space=vmem, size = 0x20000, scoped, tag = 'output window, operand 0']
    %8 = vsyncpa [#allocation3], 0
    %s9 = scalar_lea.sflag [#allocation3], 1
    %10 = vsyncpa %s9, 0
    %11 = vsyncpa [#allocation6], 0
    %12 = vsyncpa [#allocation4], 0
    %s13 = scalar_lea.sflag [#allocation4], 1
    %14 = vsyncpa %s13, 0
    loop: start=0, step=1, limit=6
    $region2: #{tpu_custom_call.1} parent=1 // loop_pre_header
      _
    $region3: #{tpu_custom_call.1} parent=1 // loop_header
      %s16 = sphi 0, %s20
      %p17 = scmp.ge.s32.totalorder %s16, 6
      %s26 = sphi 0, %s28
      %s29 = sphi 0, %s26
      %s30 = sphi 0, %s29
      %s46 = sphi 0, %s30
      %s50 = sphi 0, %s50
      %s52 = sphi 0, %s50
      %s53 = sphi 0, %s52
      %s67 = sphi 0, %s53
      %s71 = sphi 0, %s71
      %s73 = sphi 0, %s71
      %s74 = sphi 0, %s73
      %s88 = sphi 0, %s74
      %s94 = sphi 0, %s96
      %s97 = sphi 0, %s94
      %s98 = sphi 0, %s97
      %s114 = sphi 0, %s98
    $region4: #{tpu_custom_call.1} parent=1 // loop_header_branch
      %19 = sbr.rel (%p17) target = $region8
    $region5: #{tpu_custom_call.1} parent=1 // loop_body
      %s21 = ssub.s32 %s16, 1
      %s22 = ssub.s32 %s16, 2
      %s23 = sadd.s32 %s16, 1
      %s24 = ssub.s32 %s16, %s23
      %p25 = scmp.eq.s32.totalorder %s24, 0
      %s27 = sadd.s32 %s26, 1
      %s28 = scalar_select %p25, %s26, %s27
      %p31 = pneg %p25
      %p32 = scmp.eq.s32.totalorder %s16, 3
      %p33 = por %p31, %p32
      %p34 = scmp.ne.s32.totalorder %s26, %s29
      %p35 = scmp.eq.s32.totalorder %s16, 0
      %p36 = por %p34, %p35
      %p37 = scmp.ne.s32.totalorder %s26, %s29
      %p38 = scmp.eq.s32.totalorder %s21, 3
      %p39 = por %p37, %p38
      %p40 = scmp.ne.s32.totalorder %s29, %s30
      %p41 = scmp.eq.s32.totalorder %s21, 0
      %p42 = por %p40, %p41
      %p43 = scmp.ne.s32.totalorder %s29, %s30
      %p44 = scmp.eq.s32.totalorder %s22, 3
      %p45 = por %p43, %p44
      %p47 = scmp.ne.s32.totalorder %s30, %s46
      %p48 = scmp.eq.s32.totalorder %s22, 0
      %p49 = por %p47, %p48
      %s51 = sadd.s32 %s50, 1
      %p54 = scmp.eq.s32.totalorder %s16, 3
      %p55 = scmp.ne.s32.totalorder %s50, %s52
      %p56 = scmp.eq.s32.totalorder %s16, 0
      %p57 = por %p55, %p56
      %p58 = scmp.ne.s32.totalorder %s50, %s52
      %p59 = scmp.eq.s32.totalorder %s21, 3
      %p60 = por %p58, %p59
      %p61 = scmp.ne.s32.totalorder %s52, %s53
      %p62 = scmp.eq.s32.totalorder %s21, 0
      %p63 = por %p61, %p62
      %p64 = scmp.ne.s32.totalorder %s52, %s53
      %p65 = scmp.eq.s32.totalorder %s22, 3
      %p66 = por %p64, %p65
      %p68 = scmp.ne.s32.totalorder %s53, %s67
      %p69 = scmp.eq.s32.totalorder %s22, 0
      %p70 = por %p68, %p69
      %s72 = sadd.s32 %s71, 1
      %p75 = scmp.eq.s32.totalorder %s16, 3
      %p76 = scmp.ne.s32.totalorder %s71, %s73
      %p77 = scmp.eq.s32.totalorder %s16, 0
      %p78 = por %p76, %p77
      %p79 = scmp.ne.s32.totalorder %s71, %s73
      %p80 = scmp.eq.s32.totalorder %s21, 3
      %p81 = por %p79, %p80
      %p82 = scmp.ne.s32.totalorder %s73, %s74
      %p83 = scmp.eq.s32.totalorder %s21, 0
      %p84 = por %p82, %p83
      %p85 = scmp.ne.s32.totalorder %s73, %s74
      %p86 = scmp.eq.s32.totalorder %s22, 3
      %p87 = por %p85, %p86
      %p89 = scmp.ne.s32.totalorder %s74, %s88
      %p90 = scmp.eq.s32.totalorder %s22, 0
      %p91 = por %p89, %p90
      %s92 = ssub.s32 %s16, %s23
      %p93 = scmp.eq.s32.totalorder %s92, 0
      %s95 = sadd.s32 %s94, 1
      %s96 = scalar_select %p93, %s94, %s95
      %p99 = pneg %p93
      %p100 = scmp.eq.s32.totalorder %s16, 3
      %p101 = por %p99, %p100
      %p102 = scmp.ne.s32.totalorder %s94, %s97
      %p103 = scmp.eq.s32.totalorder %s16, 0
      %p104 = por %p102, %p103
      %p105 = scmp.ne.s32.totalorder %s94, %s97
      %p106 = scmp.eq.s32.totalorder %s21, 3
      %p107 = por %p105, %p106
      %p108 = scmp.ne.s32.totalorder %s97, %s98
      %p109 = scmp.eq.s32.totalorder %s21, 0
      %p110 = por %p108, %p109
      %p111 = scmp.ne.s32.totalorder %s97, %s98
      %p112 = scmp.eq.s32.totalorder %s22, 3
      %p113 = por %p111, %p112
      %p115 = scmp.ne.s32.totalorder %s98, %s114
      %p116 = scmp.eq.s32.totalorder %s22, 0
      %p117 = por %p115, %p116
      %p118 = scmp.le.s32.totalorder 1, %s16
      %p119 = scmp.lt.s32.totalorder %s16, 5
      %p120 = pnand %p118, %p119
      %p121 = pneg %p120
      // Predicated region
      $region9: #{tpu_custom_call.1} parent=5 // pred_check
        _
      $region10: #{tpu_custom_call.1} parent=5 // pred_check_branch
        %123 = sbr.rel (%p120) target = $region12
      $region11: #{tpu_custom_call.1} parent=5 // pred_region
        %s124 = ssub.s32 %s16, 1
        // Predicated region
        $region13: #{tpu_custom_call.1} parent=11 // pred_check
          %p125 = pneg %p63
        $region14: #{tpu_custom_call.1} parent=11 // pred_check_branch
          %127 = sbr.rel (%p125) target = $region16
        $region15: #{tpu_custom_call.1} parent=11 // pred_region
          %s129 = ssub.s32 2048, 2048
          %130 = vsyncadd [#allocation6], %s129
          %s131 = sshll.u32 [#allocation5], 4
          %s132 = int_to_ptr.vmem [resolvable:$true] %s131
          %137 = dma.hbm_to_vmem [thread:$0]  %s1, 2048, %s132, [#allocation6], 128, 128, 8
        $region16: #{tpu_custom_call.1} parent=11 // pred_fallthru
          _
        // Predicated region
        $region17: #{tpu_custom_call.1} parent=11 // pred_check
          %p138 = pneg %p84
        $region18: #{tpu_custom_call.1} parent=11 // pred_check_branch
          %140 = sbr.rel (%p138) target = $region20
        $region19: #{tpu_custom_call.1} parent=11 // pred_region
          %s142 = ssub.s32 2048, 2048
          %143 = vsyncadd [#allocation6], %s142
          %s144 = sshll.u32 [#allocation7], 4
          %s145 = int_to_ptr.vmem [resolvable:$true] %s144
          %150 = dma.hbm_to_vmem [thread:$0]  %s2, 2048, %s145, [#allocation6], 128, 128, 8
        $region20: #{tpu_custom_call.1} parent=11 // pred_fallthru
          _
      $region12: #{tpu_custom_call.1} parent=5 // pred_fallthru
        _
      %p151 = scmp.lt.s32.totalorder %s16, 4
      // Predicated region
      $region21: #{tpu_custom_call.1} parent=5 // pred_check
        %p152 = pneg %p151
      $region22: #{tpu_custom_call.1} parent=5 // pred_check_branch
        %154 = sbr.rel (%p152) target = $region24
      $region23: #{tpu_custom_call.1} parent=5 // pred_region
        // Predicated region
        $region25: #{tpu_custom_call.1} parent=23 // pred_check
          %p155 = pneg %p36
        $region26: #{tpu_custom_call.1} parent=23 // pred_check_branch
          %157 = sbr.rel (%p155) target = $region28
        $region27: #{tpu_custom_call.1} parent=23 // pred_region
          %s158 = sand.u32 %s26, 1
          %s159 = scalar_lea.sflag [#allocation3], %s158
          %s160 = sand.u32 %s26, 1
          %s161 = smul.addr %s160, 64
          %s162 = scalar_lea.vmem [#allocation2], %s161
          %s163 = smul.u32 16, %s16
          %s165 = ssub.s32 1024, 1024
          %166 = vsyncadd %s159, %s165
          %s167 = smul.addr %s163, 64
          %s168 = scalar_lea.hbm %s0, %s167
          %s169 = sshll.u32 %s162, 4
          %s170 = int_to_ptr.vmem [resolvable:$true] %s169
          %175 = dma.hbm_to_vmem [thread:$0]  %s168, 1024, %s170, %s159, 64, 64, 4
        $region28: #{tpu_custom_call.1} parent=23 // pred_fallthru
          _
      $region24: #{tpu_custom_call.1} parent=5 // pred_fallthru
        _
      %p176 = scmp.le.s32.totalorder 1, %s16
      %p177 = scmp.lt.s32.totalorder %s16, 5
      %p178 = pnand %p176, %p177
      %p179 = pneg %p178
      // Predicated region
      $region29: #{tpu_custom_call.1} parent=5 // pred_check
        _
      $region30: #{tpu_custom_call.1} parent=5 // pred_check_branch
        %181 = sbr.rel (%p178) target = $region32
      $region31: #{tpu_custom_call.1} parent=5 // pred_region
        %s182 = ssub.s32 %s16, 1
        %s183 = sand.u32 %s29, 1
        %s184 = scalar_lea.sflag [#allocation3], %s183
        %s185 = sand.u32 %s29, 1
        %s186 = smul.addr %s185, 64
        %s187 = scalar_lea.vmem [#allocation2], %s186
        // Predicated region
        $region33: #{tpu_custom_call.1} parent=31 // pred_check
          %p188 = pneg %p42
        $region34: #{tpu_custom_call.1} parent=31 // pred_check_branch
          %190 = sbr.rel (%p188) target = $region36
        $region35: #{tpu_custom_call.1} parent=31 // pred_region
          %191 = dma.done %s184, 1024
        $region36: #{tpu_custom_call.1} parent=31 // pred_fallthru
          _
        // Predicated region
        $region37: #{tpu_custom_call.1} parent=31 // pred_check
          %p192 = pneg %p63
        $region38: #{tpu_custom_call.1} parent=31 // pred_check_branch
          %194 = sbr.rel (%p192) target = $region40
        $region39: #{tpu_custom_call.1} parent=31 // pred_region
          %195 = dma.done [#allocation6], 2048
        $region40: #{tpu_custom_call.1} parent=31 // pred_fallthru
          _
        // Predicated region
        $region41: #{tpu_custom_call.1} parent=31 // pred_check
          %p196 = pneg %p84
        $region42: #{tpu_custom_call.1} parent=31 // pred_check_branch
          %198 = sbr.rel (%p196) target = $region44
        $region43: #{tpu_custom_call.1} parent=31 // pred_region
          %199 = dma.done [#allocation6], 2048
        $region44: #{tpu_custom_call.1} parent=31 // pred_fallthru
          _
        %s200 = sand.u32 %s29, 1
        %s201 = scalar_lea.sflag [#allocation3], %s200
        %s202 = sand.u32 %s29, 1
        %s203 = smul.addr %s202, 64
        %s204 = scalar_lea.vmem [#allocation2], %s203
        %p205 = pneg %p42
        %p206 = pneg %p39
        %p207 = pneg %p63
        %p208 = pneg %p60
        %p209 = pneg %p84
        %p210 = pneg %p81
        %p211 = pneg %p110
        %p212 = pneg %p107
        %s213 = sand.u32 %s97, 1
        %s214 = scalar_lea.sflag [#allocation4], %s213
        %s215 = sand.u32 %s97, 1
        %s216 = smul.addr %s215, 128
        %s217 = scalar_lea.vmem [#allocation8], %s216
        %s218 = smul.u32 16, %s21
        %s219 = smul.u32 16, %s21
        %v220 = vld [vmem:[%s187] sm:$0xf]
        %v221 = vld [vmem:[%s187 + $0x4] sm:$0xf]
        %v222 = vld [vmem:[%s187 + $0x8] sm:$0xf]
        %v223 = vld [vmem:[%s187 + $0xc] sm:$0xf]
        %v224 = vld [vmem:[%s187 + $0x10] sm:$0xf]
        %v225 = vld [vmem:[%s187 + $0x14] sm:$0xf]
        %v226 = vld [vmem:[%s187 + $0x18] sm:$0xf]
        %v227 = vld [vmem:[%s187 + $0x1c] sm:$0xf]
        %v228 = vld [vmem:[%s187 + $0x20] sm:$0xf]
        %v229 = vld [vmem:[%s187 + $0x24] sm:$0xf]
        %v230 = vld [vmem:[%s187 + $0x28] sm:$0xf]
        %v231 = vld [vmem:[%s187 + $0x2c] sm:$0xf]
        %v232 = vld [vmem:[%s187 + $0x30] sm:$0xf]
        %v233 = vld [vmem:[%s187 + $0x34] sm:$0xf]
        %v234 = vld [vmem:[%s187 + $0x38] sm:$0xf]
        %v235 = vld [vmem:[%s187 + $0x3c] sm:$0xf]
        %v236 = vunpack.c.l.bf16 %v220
        %v237 = vunpack.c.l.bf16 %v221
        %v238 = vunpack.c.l.bf16 %v222
        %v239 = vunpack.c.l.bf16 %v223
        %v240 = vunpack.c.l.bf16 %v224
        %v241 = vunpack.c.l.bf16 %v225
        %v242 = vunpack.c.l.bf16 %v226
        %v243 = vunpack.c.l.bf16 %v227
        %v244 = vunpack.c.l.bf16 %v228
        %v245 = vunpack.c.l.bf16 %v229
        %v246 = vunpack.c.l.bf16 %v230
        %v247 = vunpack.c.l.bf16 %v231
        %v248 = vunpack.c.l.bf16 %v232
        %v249 = vunpack.c.l.bf16 %v233
        %v250 = vunpack.c.l.bf16 %v234
        %v251 = vunpack.c.l.bf16 %v235
        %v252 = vld [vmem:[#allocation5] sm:$0xff]
        %v253 = vld [vmem:[#allocation5 + $0x8] sm:$0xff]
        %v254 = vld [vmem:[#allocation5 + $0x10] sm:$0xff]
        %v255 = vld [vmem:[#allocation5 + $0x18] sm:$0xff]
        %v256 = vld [vmem:[#allocation5 + $0x20] sm:$0xff]
        %v257 = vld [vmem:[#allocation5 + $0x28] sm:$0xff]
        %v258 = vld [vmem:[#allocation5 + $0x30] sm:$0xff]
        %v259 = vld [vmem:[#allocation5 + $0x38] sm:$0xff]
        %v260 = vld [vmem:[#allocation5 + $0x40] sm:$0xff]
        %v261 = vld [vmem:[#allocation5 + $0x48] sm:$0xff]
        %v262 = vld [vmem:[#allocation5 + $0x50] sm:$0xff]
        %v263 = vld [vmem:[#allocation5 + $0x58] sm:$0xff]
        %v264 = vld [vmem:[#allocation5 + $0x60] sm:$0xff]
        %v265 = vld [vmem:[#allocation5 + $0x68] sm:$0xff]
        %v266 = vld [vmem:[#allocation5 + $0x70] sm:$0xff]
        %v267 = vld [vmem:[#allocation5 + $0x78] sm:$0xff]
        %268 = vmatprep.subr.mxu0 0.0
        %269 = vmatpush1.msra.mxu0 %v267
        %270 = vmatprep.subr.mxu0 0.0
        %271 = vmatpush1.msra.mxu0 %v266
        %272 = vmatprep.subr.mxu0 0.0
        %273 = vmatpush1.msra.mxu0 %v265
        %274 = vmatprep.subr.mxu0 0.0
        %275 = vmatpush1.msra.mxu0 %v264
        %276 = vmatprep.subr.mxu0 0.0
        %277 = vmatpush1.msra.mxu0 %v263
        %278 = vmatprep.subr.mxu0 0.0
        %279 = vmatpush1.msra.mxu0 %v262
        %280 = vmatprep.subr.mxu0 0.0
        %281 = vmatpush1.msra.mxu0 %v261
        %282 = vmatprep.subr.mxu0 0.0
        %283 = vmatpush1.msra.mxu0 %v260
        %284 = vmatprep.subr.mxu0 0.0
        %285 = vmatpush1.msra.mxu0 %v259
        %286 = vmatprep.subr.mxu0 0.0
        %287 = vmatpush1.msra.mxu0 %v258
        %288 = vmatprep.subr.mxu0 0.0
        %289 = vmatpush1.msra.mxu0 %v257
        %290 = vmatprep.subr.mxu0 0.0
        %291 = vmatpush1.msra.mxu0 %v256
        %292 = vmatprep.subr.mxu0 0.0
        %293 = vmatpush1.msra.mxu0 %v255
        %294 = vmatprep.subr.mxu0 0.0
        %295 = vmatpush1.msra.mxu0 %v254
        %296 = vmatprep.subr.mxu0 0.0
        %297 = vmatpush1.msra.mxu0 %v253
        %298 = vmatprep.subr.mxu0 0.0
        %299 = vmatpush1.msra.mxu0 %v252
        %300 = vmatprep.subr.mxu0 0.0
        %301 = vmatpush2.msra.mxu0 0.0
        %302 = vmatprep.subr.mxu0 0.0
        %303 = vmatpush2.msra.mxu0 0.0
        %304 = vmatprep.subr.mxu0 0.0
        %305 = vmatpush2.msra.mxu0 0.0
        %306 = vmatprep.subr.mxu0 0.0
        %307 = vmatpush2.msra.mxu0 0.0
        %308 = vmatprep.subr.mxu0 0.0
        %309 = vmatpush2.msra.mxu0 0.0
        %310 = vmatprep.subr.mxu0 0.0
        %311 = vmatpush2.msra.mxu0 0.0
        %312 = vmatprep.subr.mxu0 0.0
        %313 = vmatpush2.msra.mxu0 0.0
        %314 = vmatprep.subr.mxu0 0.0
        %315 = vmatpush2.msra.mxu0 0.0
        %316 = vmatprep.subr.mxu0 0.0
        %317 = vmatpush2.msra.mxu0 0.0
        %318 = vmatprep.subr.mxu0 0.0
        %319 = vmatpush2.msra.mxu0 0.0
        %320 = vmatprep.subr.mxu0 0.0
        %321 = vmatpush2.msra.mxu0 0.0
        %322 = vmatprep.subr.mxu0 0.0
        %323 = vmatpush2.msra.mxu0 0.0
        %324 = vmatprep.subr.mxu0 0.0
        %325 = vmatpush2.msra.mxu0 0.0
        %326 = vmatprep.subr.mxu0 0.0
        %327 = vmatpush2.msra.mxu0 0.0
        %328 = vmatprep.subr.mxu0 0.0
        %329 = vmatpush2.msra.mxu0 0.0
        %330 = vmatprep.subr.mxu0 0.0
        %331 = vmatpush2.msra.mxu0 0.0
        %332 = vmatprep.mubr.f32.mxu0 0.0
        %333 = vmatmul.mubr.f32.gmra.mxu0 %v236
        %v334 = vpop.f32.mrf.mxu0
        %v335 = vadd.f32 0.0, %v334
        %v336 = vpop.f32.mrf.mxu0
        %337 = vmatprep.mubr.f32.mxu0 0.0
        %338 = vmatmul.mubr.f32.gmra.mxu0 %v237
        %v339 = vpop.f32.mrf.mxu0
        %v340 = vadd.f32 0.0, %v339
        %v341 = vpop.f32.mrf.mxu0
        %342 = vmatprep.mubr.f32.mxu0 0.0
        %343 = vmatmul.mubr.f32.gmra.mxu0 %v238
        %v344 = vpop.f32.mrf.mxu0
        %v345 = vadd.f32 0.0, %v344
        %v346 = vpop.f32.mrf.mxu0
        %347 = vmatprep.mubr.f32.mxu0 0.0
        %348 = vmatmul.mubr.f32.gmra.mxu0 %v239
        %v349 = vpop.f32.mrf.mxu0
        %v350 = vadd.f32 0.0, %v349
        %v351 = vpop.f32.mrf.mxu0
        %352 = vmatprep.mubr.f32.mxu0 0.0
        %353 = vmatmul.mubr.f32.gmra.mxu0 %v240
        %v354 = vpop.f32.mrf.mxu0
        %v355 = vadd.f32 0.0, %v354
        %v356 = vpop.f32.mrf.mxu0
        %357 = vmatprep.mubr.f32.mxu0 0.0
        %358 = vmatmul.mubr.f32.gmra.mxu0 %v241
        %v359 = vpop.f32.mrf.mxu0
        %v360 = vadd.f32 0.0, %v359
        %v361 = vpop.f32.mrf.mxu0
        %362 = vmatprep.mubr.f32.mxu0 0.0
        %363 = vmatmul.mubr.f32.gmra.mxu0 %v242
        %v364 = vpop.f32.mrf.mxu0
        %v365 = vadd.f32 0.0, %v364
        %v366 = vpop.f32.mrf.mxu0
        %367 = vmatprep.mubr.f32.mxu0 0.0
        %368 = vmatmul.mubr.f32.gmra.mxu0 %v243
        %v369 = vpop.f32.mrf.mxu0
        %v370 = vadd.f32 0.0, %v369
        %v371 = vpop.f32.mrf.mxu0
        %372 = vmatprep.mubr.f32.mxu0 0.0
        %373 = vmatmul.mubr.f32.gmra.mxu0 %v244
        %v374 = vpop.f32.mrf.mxu0
        %v375 = vadd.f32 0.0, %v374
        %v376 = vpop.f32.mrf.mxu0
        %377 = vmatprep.mubr.f32.mxu0 0.0
        %378 = vmatmul.mubr.f32.gmra.mxu0 %v245
        %v379 = vpop.f32.mrf.mxu0
        %v380 = vadd.f32 0.0, %v379
        %v381 = vpop.f32.mrf.mxu0
        %382 = vmatprep.mubr.f32.mxu0 0.0
        %383 = vmatmul.mubr.f32.gmra.mxu0 %v246
        %v384 = vpop.f32.mrf.mxu0
        %v385 = vadd.f32 0.0, %v384
        %v386 = vpop.f32.mrf.mxu0
        %387 = vmatprep.mubr.f32.mxu0 0.0
        %388 = vmatmul.mubr.f32.gmra.mxu0 %v247
        %v389 = vpop.f32.mrf.mxu0
        %v390 = vadd.f32 0.0, %v389
        %v391 = vpop.f32.mrf.mxu0
        %392 = vmatprep.mubr.f32.mxu0 0.0
        %393 = vmatmul.mubr.f32.gmra.mxu0 %v248
        %v394 = vpop.f32.mrf.mxu0
        %v395 = vadd.f32 0.0, %v394
        %v396 = vpop.f32.mrf.mxu0
        %397 = vmatprep.mubr.f32.mxu0 0.0
        %398 = vmatmul.mubr.f32.gmra.mxu0 %v249
        %v399 = vpop.f32.mrf.mxu0
        %v400 = vadd.f32 0.0, %v399
        %v401 = vpop.f32.mrf.mxu0
        %402 = vmatprep.mubr.f32.mxu0 0.0
        %403 = vmatmul.mubr.f32.gmra.mxu0 %v250
        %v404 = vpop.f32.mrf.mxu0
        %v405 = vadd.f32 0.0, %v404
        %v406 = vpop.f32.mrf.mxu0
        %407 = vmatprep.mubr.f32.mxu0 0.0
        %408 = vmatmul.mubr.f32.gmra.mxu0 %v251
        %v409 = vpop.f32.mrf.mxu0
        %v410 = vadd.f32 0.0, %v409
        %v411 = vpop.f32.mrf.mxu0
        %412 = vdwg.mxu0
        %v413 = vmul.f32 %v236, %v335
        %v414 = vmul.f32 %v237, %v340
        %v415 = vmul.f32 %v238, %v345
        %v416 = vmul.f32 %v239, %v350
        %v417 = vmul.f32 %v240, %v355
        %v418 = vmul.f32 %v241, %v360
        %v419 = vmul.f32 %v242, %v365
        %v420 = vmul.f32 %v243, %v370
        %v421 = vmul.f32 %v244, %v375
        %v422 = vmul.f32 %v245, %v380
        %v423 = vmul.f32 %v246, %v385
        %v424 = vmul.f32 %v247, %v390
        %v425 = vmul.f32 %v248, %v395
        %v426 = vmul.f32 %v249, %v400
        %v427 = vmul.f32 %v250, %v405
        %v428 = vmul.f32 %v251, %v410
        %v429 = vsub.f32 1.0, %v236
        %v430 = vsub.f32 1.0, %v237
        %v431 = vsub.f32 1.0, %v238
        %v432 = vsub.f32 1.0, %v239
        %v433 = vsub.f32 1.0, %v240
        %v434 = vsub.f32 1.0, %v241
        %v435 = vsub.f32 1.0, %v242
        %v436 = vsub.f32 1.0, %v243
        %v437 = vsub.f32 1.0, %v244
        %v438 = vsub.f32 1.0, %v245
        %v439 = vsub.f32 1.0, %v246
        %v440 = vsub.f32 1.0, %v247
        %v441 = vsub.f32 1.0, %v248
        %v442 = vsub.f32 1.0, %v249
        %v443 = vsub.f32 1.0, %v250
        %v444 = vsub.f32 1.0, %v251
        %v445 = vmul.f32 %v429, -16.0
        %v446 = vmul.f32 %v430, -16.0
        %v447 = vmul.f32 %v431, -16.0
        %v448 = vmul.f32 %v432, -16.0
        %v449 = vmul.f32 %v433, -16.0
        %v450 = vmul.f32 %v434, -16.0
        %v451 = vmul.f32 %v435, -16.0
        %v452 = vmul.f32 %v436, -16.0
        %v453 = vmul.f32 %v437, -16.0
        %v454 = vmul.f32 %v438, -16.0
        %v455 = vmul.f32 %v439, -16.0
        %v456 = vmul.f32 %v440, -16.0
        %v457 = vmul.f32 %v441, -16.0
        %v458 = vmul.f32 %v442, -16.0
        %v459 = vmul.f32 %v443, -16.0
        %v460 = vmul.f32 %v444, -16.0
        %v461 = vadd.f32 %v413, %v445
        %v462 = vadd.f32 %v414, %v446
        %v463 = vadd.f32 %v415, %v447
        %v464 = vadd.f32 %v416, %v448
        %v465 = vadd.f32 %v417, %v449
        %v466 = vadd.f32 %v418, %v450
        %v467 = vadd.f32 %v419, %v451
        %v468 = vadd.f32 %v420, %v452
        %v469 = vadd.f32 %v421, %v453
        %v470 = vadd.f32 %v422, %v454
        %v471 = vadd.f32 %v423, %v455
        %v472 = vadd.f32 %v424, %v456
        %v473 = vadd.f32 %v425, %v457
        %v474 = vadd.f32 %v426, %v458
        %v475 = vadd.f32 %v427, %v459
        %v476 = vadd.f32 %v428, %v460
        %477 = vmax.xlane.f32.xlu0 %v461
        %v478 = vpop.xlane.xlu0 %477
        %479 = vmax.xlane.f32.xlu0 %v462
        %v480 = vpop.xlane.xlu0 %479
        %481 = vmax.xlane.f32.xlu0 %v463
        %v482 = vpop.xlane.xlu0 %481
        %483 = vmax.xlane.f32.xlu0 %v464
        %v484 = vpop.xlane.xlu0 %483
        %485 = vmax.xlane.f32.xlu0 %v465
        %v486 = vpop.xlane.xlu0 %485
        %487 = vmax.xlane.f32.xlu0 %v466
        %v488 = vpop.xlane.xlu0 %487
        %489 = vmax.xlane.f32.xlu0 %v467
        %v490 = vpop.xlane.xlu0 %489
        %491 = vmax.xlane.f32.xlu0 %v468
        %v492 = vpop.xlane.xlu0 %491
        %493 = vmax.xlane.f32.xlu0 %v469
        %v494 = vpop.xlane.xlu0 %493
        %495 = vmax.xlane.f32.xlu0 %v470
        %v496 = vpop.xlane.xlu0 %495
        %497 = vmax.xlane.f32.xlu0 %v471
        %v498 = vpop.xlane.xlu0 %497
        %499 = vmax.xlane.f32.xlu0 %v472
        %v500 = vpop.xlane.xlu0 %499
        %501 = vmax.xlane.f32.xlu0 %v473
        %v502 = vpop.xlane.xlu0 %501
        %503 = vmax.xlane.f32.xlu0 %v474
        %v504 = vpop.xlane.xlu0 %503
        %505 = vmax.xlane.f32.xlu0 %v475
        %v506 = vpop.xlane.xlu0 %505
        %507 = vmax.xlane.f32.xlu0 %v476
        %v508 = vpop.xlane.xlu0 %507
        %v509 = vsub.f32 %v461, %v478
        %v510 = vsub.f32 %v462, %v480
        %v511 = vsub.f32 %v463, %v482
        %v512 = vsub.f32 %v464, %v484
        %v513 = vsub.f32 %v465, %v486
        %v514 = vsub.f32 %v466, %v488
        %v515 = vsub.f32 %v467, %v490
        %v516 = vsub.f32 %v468, %v492
        %v517 = vsub.f32 %v469, %v494
        %v518 = vsub.f32 %v470, %v496
        %v519 = vsub.f32 %v471, %v498
        %v520 = vsub.f32 %v472, %v500
        %v521 = vsub.f32 %v473, %v502
        %v522 = vsub.f32 %v474, %v504
        %v523 = vsub.f32 %v475, %v506
        %v524 = vsub.f32 %v476, %v508
        %v525 = vmul.f32 %v509, 1.442695
        %v526 = vpow.pop %v525
        %v527 = vmul.f32 %v510, 1.442695
        %v528 = vpow.pop %v527
        %v529 = vmul.f32 %v511, 1.442695
        %v530 = vpow.pop %v529
        %v531 = vmul.f32 %v512, 1.442695
        %v532 = vpow.pop %v531
        %v533 = vmul.f32 %v513, 1.442695
        %v534 = vpow.pop %v533
        %v535 = vmul.f32 %v514, 1.442695
        %v536 = vpow.pop %v535
        %v537 = vmul.f32 %v515, 1.442695
        %v538 = vpow.pop %v537
        %v539 = vmul.f32 %v516, 1.442695
        %v540 = vpow.pop %v539
        %v541 = vmul.f32 %v517, 1.442695
        %v542 = vpow.pop %v541
        %v543 = vmul.f32 %v518, 1.442695
        %v544 = vpow.pop %v543
        %v545 = vmul.f32 %v519, 1.442695
        %v546 = vpow.pop %v545
        %v547 = vmul.f32 %v520, 1.442695
        %v548 = vpow.pop %v547
        %v549 = vmul.f32 %v521, 1.442695
        %v550 = vpow.pop %v549
        %v551 = vmul.f32 %v522, 1.442695
        %v552 = vpow.pop %v551
        %v553 = vmul.f32 %v523, 1.442695
        %v554 = vpow.pop %v553
        %v555 = vmul.f32 %v524, 1.442695
        %v556 = vpow.pop %v555
        %v557 = vld [vmem:[#allocation7] sm:$0xff]
        %v558 = vld [vmem:[#allocation7 + $0x8] sm:$0xff]
        %v559 = vld [vmem:[#allocation7 + $0x10] sm:$0xff]
        %v560 = vld [vmem:[#allocation7 + $0x18] sm:$0xff]
        %v561 = vld [vmem:[#allocation7 + $0x20] sm:$0xff]
        %v562 = vld [vmem:[#allocation7 + $0x28] sm:$0xff]
        %v563 = vld [vmem:[#allocation7 + $0x30] sm:$0xff]
        %v564 = vld [vmem:[#allocation7 + $0x38] sm:$0xff]
        %v565 = vld [vmem:[#allocation7 + $0x40] sm:$0xff]
        %v566 = vld [vmem:[#allocation7 + $0x48] sm:$0xff]
        %v567 = vld [vmem:[#allocation7 + $0x50] sm:$0xff]
        %v568 = vld [vmem:[#allocation7 + $0x58] sm:$0xff]
        %v569 = vld [vmem:[#allocation7 + $0x60] sm:$0xff]
        %v570 = vld [vmem:[#allocation7 + $0x68] sm:$0xff]
        %v571 = vld [vmem:[#allocation7 + $0x70] sm:$0xff]
        %v572 = vld [vmem:[#allocation7 + $0x78] sm:$0xff]
        %573 = vmatprep.subr.mxu0 0.0
        %574 = vmatpush1.msra.mxu0 %v572
        %575 = vmatprep.subr.mxu0 0.0
        %576 = vmatpush1.msra.mxu0 %v571
        %577 = vmatprep.subr.mxu0 0.0
        %578 = vmatpush1.msra.mxu0 %v570
        %579 = vmatprep.subr.mxu0 0.0
        %580 = vmatpush1.msra.mxu0 %v569
        %581 = vmatprep.subr.mxu0 0.0
        %582 = vmatpush1.msra.mxu0 %v568
        %583 = vmatprep.subr.mxu0 0.0
        %584 = vmatpush1.msra.mxu0 %v567
        %585 = vmatprep.subr.mxu0 0.0
        %586 = vmatpush1.msra.mxu0 %v566
        %587 = vmatprep.subr.mxu0 0.0
        %588 = vmatpush1.msra.mxu0 %v565
        %589 = vmatprep.subr.mxu0 0.0
        %590 = vmatpush1.msra.mxu0 %v564
        %591 = vmatprep.subr.mxu0 0.0
        %592 = vmatpush1.msra.mxu0 %v563
        %593 = vmatprep.subr.mxu0 0.0
        %594 = vmatpush1.msra.mxu0 %v562
        %595 = vmatprep.subr.mxu0 0.0
        %596 = vmatpush1.msra.mxu0 %v561
        %597 = vmatprep.subr.mxu0 0.0
        %598 = vmatpush1.msra.mxu0 %v560
        %599 = vmatprep.subr.mxu0 0.0
        %600 = vmatpush1.msra.mxu0 %v559
        %601 = vmatprep.subr.mxu0 0.0
        %602 = vmatpush1.msra.mxu0 %v558
        %603 = vmatprep.subr.mxu0 0.0
        %604 = vmatpush1.msra.mxu0 %v557
        %605 = vmatprep.subr.mxu0 0.0
        %606 = vmatpush2.msra.mxu0 0.0
        %607 = vmatprep.subr.mxu0 0.0
        %608 = vmatpush2.msra.mxu0 0.0
        %609 = vmatprep.subr.mxu0 0.0
        %610 = vmatpush2.msra.mxu0 0.0
        %611 = vmatprep.subr.mxu0 0.0
        %612 = vmatpush2.msra.mxu0 0.0
        %613 = vmatprep.subr.mxu0 0.0
        %614 = vmatpush2.msra.mxu0 0.0
        %615 = vmatprep.subr.mxu0 0.0
        %616 = vmatpush2.msra.mxu0 0.0
        %617 = vmatprep.subr.mxu0 0.0
        %618 = vmatpush2.msra.mxu0 0.0
        %619 = vmatprep.subr.mxu0 0.0
        %620 = vmatpush2.msra.mxu0 0.0
        %621 = vmatprep.subr.mxu0 0.0
        %622 = vmatpush2.msra.mxu0 0.0
        %623 = vmatprep.subr.mxu0 0.0
        %624 = vmatpush2.msra.mxu0 0.0
        %625 = vmatprep.subr.mxu0 0.0
        %626 = vmatpush2.msra.mxu0 0.0
        %627 = vmatprep.subr.mxu0 0.0
        %628 = vmatpush2.msra.mxu0 0.0
        %629 = vmatprep.subr.mxu0 0.0
        %630 = vmatpush2.msra.mxu0 0.0
        %631 = vmatprep.subr.mxu0 0.0
        %632 = vmatpush2.msra.mxu0 0.0
        %633 = vmatprep.subr.mxu0 0.0
        %634 = vmatpush2.msra.mxu0 0.0
        %635 = vmatprep.subr.mxu0 0.0
        %636 = vmatpush2.msra.mxu0 0.0
        %637 = vmatprep.mubr.f32.mxu0 0.0
        %638 = vmatmul.mubr.f32.gmra.mxu0 %v526
        %v639 = vpop.f32.mrf.mxu0
        %v640 = vadd.f32 0.0, %v639
        %v641 = vpop.f32.mrf.mxu0
        %642 = vmatprep.mubr.f32.mxu0 0.0
        %643 = vmatmul.mubr.f32.gmra.mxu0 %v528
        %v644 = vpop.f32.mrf.mxu0
        %v645 = vadd.f32 0.0, %v644
        %v646 = vpop.f32.mrf.mxu0
        %647 = vmatprep.mubr.f32.mxu0 0.0
        %648 = vmatmul.mubr.f32.gmra.mxu0 %v530
        %v649 = vpop.f32.mrf.mxu0
        %v650 = vadd.f32 0.0, %v649
        %v651 = vpop.f32.mrf.mxu0
        %652 = vmatprep.mubr.f32.mxu0 0.0
        %653 = vmatmul.mubr.f32.gmra.mxu0 %v532
        %v654 = vpop.f32.mrf.mxu0
        %v655 = vadd.f32 0.0, %v654
        %v656 = vpop.f32.mrf.mxu0
        %657 = vmatprep.mubr.f32.mxu0 0.0
        %658 = vmatmul.mubr.f32.gmra.mxu0 %v534
        %v659 = vpop.f32.mrf.mxu0
        %v660 = vadd.f32 0.0, %v659
        %v661 = vpop.f32.mrf.mxu0
        %662 = vmatprep.mubr.f32.mxu0 0.0
        %663 = vmatmul.mubr.f32.gmra.mxu0 %v536
        %v664 = vpop.f32.mrf.mxu0
        %v665 = vadd.f32 0.0, %v664
        %v666 = vpop.f32.mrf.mxu0
        %667 = vmatprep.mubr.f32.mxu0 0.0
        %668 = vmatmul.mubr.f32.gmra.mxu0 %v538
        %v669 = vpop.f32.mrf.mxu0
        %v670 = vadd.f32 0.0, %v669
        %v671 = vpop.f32.mrf.mxu0
        %672 = vmatprep.mubr.f32.mxu0 0.0
        %673 = vmatmul.mubr.f32.gmra.mxu0 %v540
        %v674 = vpop.f32.mrf.mxu0
        %v675 = vadd.f32 0.0, %v674
        %v676 = vpop.f32.mrf.mxu0
        %677 = vmatprep.mubr.f32.mxu0 0.0
        %678 = vmatmul.mubr.f32.gmra.mxu0 %v542
        %v679 = vpop.f32.mrf.mxu0
        %v680 = vadd.f32 0.0, %v679
        %v681 = vpop.f32.mrf.mxu0
        %682 = vmatprep.mubr.f32.mxu0 0.0
        %683 = vmatmul.mubr.f32.gmra.mxu0 %v544
        %v684 = vpop.f32.mrf.mxu0
        %v685 = vadd.f32 0.0, %v684
        %v686 = vpop.f32.mrf.mxu0
        %687 = vmatprep.mubr.f32.mxu0 0.0
        %688 = vmatmul.mubr.f32.gmra.mxu0 %v546
        %v689 = vpop.f32.mrf.mxu0
        %v690 = vadd.f32 0.0, %v689
        %v691 = vpop.f32.mrf.mxu0
        %692 = vmatprep.mubr.f32.mxu0 0.0
        %693 = vmatmul.mubr.f32.gmra.mxu0 %v548
        %v694 = vpop.f32.mrf.mxu0
        %v695 = vadd.f32 0.0, %v694
        %v696 = vpop.f32.mrf.mxu0
        %697 = vmatprep.mubr.f32.mxu0 0.0
        %698 = vmatmul.mubr.f32.gmra.mxu0 %v550
        %v699 = vpop.f32.mrf.mxu0
        %v700 = vadd.f32 0.0, %v699
        %v701 = vpop.f32.mrf.mxu0
        %702 = vmatprep.mubr.f32.mxu0 0.0
        %703 = vmatmul.mubr.f32.gmra.mxu0 %v552
        %v704 = vpop.f32.mrf.mxu0
        %v705 = vadd.f32 0.0, %v704
        %v706 = vpop.f32.mrf.mxu0
        %707 = vmatprep.mubr.f32.mxu0 0.0
        %708 = vmatmul.mubr.f32.gmra.mxu0 %v554
        %v709 = vpop.f32.mrf.mxu0
        %v710 = vadd.f32 0.0, %v709
        %v711 = vpop.f32.mrf.mxu0
        %712 = vmatprep.mubr.f32.mxu0 0.0
        %713 = vmatmul.mubr.f32.gmra.mxu0 %v556
        %v714 = vpop.f32.mrf.mxu0
        %v715 = vadd.f32 0.0, %v714
        %v716 = vpop.f32.mrf.mxu0
        %717 = vdwg.mxu0
        %v718 = vlog2.pop %v640
        %v719 = vmul.f32 %v718, 0.6931472
        %v720 = vlog2.pop %v645
        %v721 = vmul.f32 %v720, 0.6931472
        %v722 = vlog2.pop %v650
        %v723 = vmul.f32 %v722, 0.6931472
        %v724 = vlog2.pop %v655
        %v725 = vmul.f32 %v724, 0.6931472
        %v726 = vlog2.pop %v660
        %v727 = vmul.f32 %v726, 0.6931472
        %v728 = vlog2.pop %v665
        %v729 = vmul.f32 %v728, 0.6931472
        %v730 = vlog2.pop %v670
        %v731 = vmul.f32 %v730, 0.6931472
        %v732 = vlog2.pop %v675
        %v733 = vmul.f32 %v732, 0.6931472
        %v734 = vlog2.pop %v680
        %v735 = vmul.f32 %v734, 0.6931472
        %v736 = vlog2.pop %v685
        %v737 = vmul.f32 %v736, 0.6931472
        %v738 = vlog2.pop %v690
        %v739 = vmul.f32 %v738, 0.6931472
        %v740 = vlog2.pop %v695
        %v741 = vmul.f32 %v740, 0.6931472
        %v742 = vlog2.pop %v700
        %v743 = vmul.f32 %v742, 0.6931472
        %v744 = vlog2.pop %v705
        %v745 = vmul.f32 %v744, 0.6931472
        %v746 = vlog2.pop %v710
        %v747 = vmul.f32 %v746, 0.6931472
        %v748 = vlog2.pop %v715
        %v749 = vmul.f32 %v748, 0.6931472
        %v750 = vsub.f32 %v509, %v719
        %v751 = vsub.f32 %v510, %v721
        %v752 = vsub.f32 %v511, %v723
        %v753 = vsub.f32 %v512, %v725
        %v754 = vsub.f32 %v513, %v727
        %v755 = vsub.f32 %v514, %v729
        %v756 = vsub.f32 %v515, %v731
        %v757 = vsub.f32 %v516, %v733
        %v758 = vsub.f32 %v517, %v735
        %v759 = vsub.f32 %v518, %v737
        %v760 = vsub.f32 %v519, %v739
        %v761 = vsub.f32 %v520, %v741
        %v762 = vsub.f32 %v521, %v743
        %v763 = vsub.f32 %v522, %v745
        %v764 = vsub.f32 %v523, %v747
        %v765 = vsub.f32 %v524, %v749
        %766 = vst [vmem:[%s217] sm:$0xff] %v750
        %767 = vst [vmem:[%s217 + $0x8] sm:$0xff] %v751
        %768 = vst [vmem:[%s217 + $0x10] sm:$0xff] %v752
        %769 = vst [vmem:[%s217 + $0x18] sm:$0xff] %v753
        %770 = vst [vmem:[%s217 + $0x20] sm:$0xff] %v754
        %771 = vst [vmem:[%s217 + $0x28] sm:$0xff] %v755
        %772 = vst [vmem:[%s217 + $0x30] sm:$0xff] %v756
        %773 = vst [vmem:[%s217 + $0x38] sm:$0xff] %v757
        %774 = vst [vmem:[%s217 + $0x40] sm:$0xff] %v758
        %775 = vst [vmem:[%s217 + $0x48] sm:$0xff] %v759
        %776 = vst [vmem:[%s217 + $0x50] sm:$0xff] %v760
        %777 = vst [vmem:[%s217 + $0x58] sm:$0xff] %v761
        %778 = vst [vmem:[%s217 + $0x60] sm:$0xff] %v762
        %779 = vst [vmem:[%s217 + $0x68] sm:$0xff] %v763
        %780 = vst [vmem:[%s217 + $0x70] sm:$0xff] %v764
        %781 = vst [vmem:[%s217 + $0x78] sm:$0xff] %v765
        %s782 = sand.u32 %s97, 1
        %s783 = scalar_lea.sflag [#allocation4], %s782
        %s784 = sand.u32 %s97, 1
        %s785 = smul.addr %s784, 128
        %s786 = scalar_lea.vmem [#allocation8], %s785
        // Predicated region
        $region45: #{tpu_custom_call.1} parent=31 // pred_check
          %p787 = pneg %p107
        $region46: #{tpu_custom_call.1} parent=31 // pred_check_branch
          %789 = sbr.rel (%p787) target = $region48
        $region47: #{tpu_custom_call.1} parent=31 // pred_region
          %s790 = smul.u32 16, %s21
          %s792 = ssub.s32 2048, 2048
          %793 = vsyncadd %s783, %s792
          %s794 = smul.addr %s790, 128
          %s795 = scalar_lea.hbm %s3, %s794
          %s796 = sshll.u32 %s786, 4
          %s797 = int_to_ptr.vmem [resolvable:$true] %s796
          %802 = dma.vmem_to_hbm [thread:$0]  %s797, 2048, %s795, %s783, 128, 128, 8
        $region48: #{tpu_custom_call.1} parent=31 // pred_fallthru
          _
      $region32: #{tpu_custom_call.1} parent=5 // pred_fallthru
        _
      %p803 = scmp.le.s32.totalorder 2, %s16
      // Predicated region
      $region49: #{tpu_custom_call.1} parent=5 // pred_check
        %p804 = pneg %p803
      $region50: #{tpu_custom_call.1} parent=5 // pred_check_branch
        %806 = sbr.rel (%p804) target = $region52
      $region51: #{tpu_custom_call.1} parent=5 // pred_region
        %s807 = ssub.s32 %s16, 2
        // Predicated region
        $region53: #{tpu_custom_call.1} parent=51 // pred_check
          %p808 = pneg %p113
        $region54: #{tpu_custom_call.1} parent=51 // pred_check_branch
          %810 = sbr.rel (%p808) target = $region56
        $region55: #{tpu_custom_call.1} parent=51 // pred_region
          %s811 = sand.u32 %s98, 1
          %s812 = scalar_lea.sflag [#allocation4], %s811
          %s813 = sand.u32 %s98, 1
          %s814 = smul.addr %s813, 128
          %s815 = scalar_lea.vmem [#allocation8], %s814
          %816 = dma.done %s812, 2048
        $region56: #{tpu_custom_call.1} parent=51 // pred_fallthru
          _
      $region52: #{tpu_custom_call.1} parent=5 // pred_fallthru
        _
    $region6: #{tpu_custom_call.1} parent=1 // loop_footer
      %s20 = sadd.s32 1, %s16
    $region7: #{tpu_custom_call.1} parent=1 // loop_footer_branch
      %15 = sbr.rel target = $region3
    $region8: #{tpu_custom_call.1} parent=1 // loop_exit
      _
    %817 = vsyncpa [#allocation3], 1
    %s818 = scalar_lea.sflag [#allocation3], 1
    %819 = vsyncpa %s818, 1
    %820 = vsyncpa [#allocation6], 1
    %821 = vsyncpa [#allocation4], 1
    %s822 = scalar_lea.sflag [#allocation4], 1
    %823 = vsyncpa %s822, 1

</llo_original>
